<compile_context>
chip_gen: v6e
topology: v6e:2x2x1
jax: 0.10.0
libtpu: 0.0.40
codegen_flags: <defaults>
</compile_context>

<pallas_src>
import jax
import jax.numpy as jnp
from jax.experimental import pallas as pl
from jax.experimental.pallas import tpu as pltpu


_LANE_ALIGN = 256          # fills the 256-wide MXU on v6e/v7x; fine on v5e too
_SUBLANE_ALIGN = 16        # bf16: 2 rows per sublane -> unmasked x tiles
_MAX_TM = 512
_MAX_TN = 512
_MAX_TK = 1024
_SCOPED_VMEM_DEFAULT = 32 * 1024 * 1024


def _round_up(x: int, m: int) -> int:
    return (x + m - 1) // m * m


def _linear_kernel(x_ref, w_ref, b_ref, o_ref, acc_ref):
    # x_ref: [tm, tk] bf16, w_ref: [tk, tn] bf16, b_ref: [1, tn] f32,
    # o_ref: [tm, tn] f32, acc_ref: [tm, tn] f32 VMEM scratch.
    k = pl.program_id(2)

    @pl.when(k == 0)
    def _():
        acc_ref[...] = jnp.zeros_like(acc_ref)

    # bf16 x bf16 -> f32 accumulate on the MXU.
    acc_ref[...] += jnp.dot(
        x_ref[...], w_ref[...], preferred_element_type=jnp.float32
    )

    @pl.when(k == pl.num_programs(2) - 1)
    def _():
        # Bias is added exactly once, in the epilogue.
        o_ref[...] = (acc_ref[...] + b_ref[...]).astype(o_ref.dtype)


def prepare_mlp_toy_params(w, b, compute_dtype=jnp.bfloat16):
    """One-time parameter preparation (hoisted out of the per-call forward).

    w: [output_size, input_size]  (torch nn.Linear layout)
    b: [output_size]
    Pads K/N up to MXU-friendly tile multiples and casts the weight to bf16
    once, so each forward only pads/casts the activations.
    """
    N, K = w.shape
    tk = min(_round_up(K, _LANE_ALIGN), _MAX_TK)
    tn = min(_round_up(N, _LANE_ALIGN), _MAX_TN)
    K_pad = _round_up(K, tk)
    N_pad = _round_up(N, tn)

    w_t = jnp.asarray(w).T                                   # [K, N]
    w_p = jnp.pad(w_t, ((0, K_pad - K), (0, N_pad - N))).astype(compute_dtype)
    b_p = jnp.pad(jnp.asarray(b).astype(jnp.float32),
                  (0, N_pad - N)).reshape(1, N_pad)

    return dict(w_p=w_p, b_p=b_p, K=K, N=N, K_pad=K_pad, N_pad=N_pad,
                tk=tk, tn=tn, compute_dtype=compute_dtype)


def mlp_toy_arch_forward(x, params):
    """Pallas equivalent of MLPToyArch.forward. x: [B, input_size] f32."""
    if x.ndim != 2:
        raise RuntimeError(
            'Tensor rank ({}) is not supported!'.format(x.ndim))

    M, K = x.shape
    if K != params["K"]:
        raise ValueError("input features {} != weight in-features {}".format(
            K, params["K"]))

    K_pad, N_pad = params["K_pad"], params["N_pad"]
    tk, tn = params["tk"], params["tn"]
    N = params["N"]
    compute_dtype = params["compute_dtype"]

    # Choose the M tile first, then pad M up to a multiple of it.
    tm = min(_round_up(M, _SUBLANE_ALIGN), _MAX_TM)
    M_pad = _round_up(M, tm)

    # v7x megacore: if the whole problem is a single parallel block, split N
    # so both TensorCores get work (no effect on single-TC v5e/v6e).
    if (M_pad // tm) == 1 and (N_pad // tn) == 1 and tn > _LANE_ALIGN:
        tn = tn // 2

    x_p = jnp.pad(x, ((0, M_pad - M), (0, K_pad - K))).astype(compute_dtype)

    grid = (M_pad // tm, N_pad // tn, K_pad // tk)

    # Double-buffered inputs/outputs + resident f32 accumulator.
    in_bytes = jnp.dtype(compute_dtype).itemsize
    vmem_need = (2 * (tm * tk + tk * tn) * in_bytes
                 + 2 * tn * 4 + 2 * tm * tn * 4 + tm * tn * 4)
    vmem_limit = (vmem_need * 2
                  if vmem_need * 2 > _SCOPED_VMEM_DEFAULT else None)

    cost = pl.CostEstimate(
        flops=2 * M_pad * N_pad * K_pad,
        transcendentals=0,
        bytes_accessed=(M_pad * K_pad * in_bytes + K_pad * N_pad * in_bytes
                        + N_pad * 4 + M_pad * N_pad * 4),
    )

    out_p = pl.pallas_call(
        _linear_kernel,
        out_shape=jax.ShapeDtypeStruct((M_pad, N_pad), jnp.float32),
        grid_spec=pltpu.PrefetchScalarGridSpec(
            num_scalar_prefetch=0,
            grid=grid,
            in_specs=[
                pl.BlockSpec((tm, tk), lambda i, j, k: (i, k)),
                pl.BlockSpec((tk, tn), lambda i, j, k: (k, j)),
                pl.BlockSpec((1, tn), lambda i, j, k: (0, j)),
            ],
            out_specs=pl.BlockSpec((tm, tn), lambda i, j, k: (i, j)),
            scratch_shapes=[pltpu.VMEM((tm, tn), jnp.float32)],
        ),
        compiler_params=pltpu.CompilerParams(
            dimension_semantics=("parallel", "parallel", "arbitrary"),
            vmem_limit_bytes=vmem_limit,
        ),
        cost_estimate=cost,
    )(x_p, params["w_p"], params["b_p"])

    return out_p[:M, :N]


if __name__ == "__main__":
    # Module hyper-params (hidden_size / n_layers / dropout_prob are unused by
    # the reference forward, which only applies self.clf = nn.Linear).
    batch = 8
    input_size = 32
    output_size = 16

    key = jax.random.PRNGKey(0)
    kx, kw, kb = jax.random.split(key, 3)

    x = jax.random.normal(kx, (batch, input_size), dtype=jnp.float32)

    # Deterministic parameter init (Kaiming-uniform-like bound, as in
    # torch.nn.Linear's default init). Torch layout: [out_features, in_features].
    bound = 1.0 / jnp.sqrt(jnp.float32(input_size))
    w = jax.random.uniform(kw, (output_size, input_size),
                           minval=-bound, maxval=bound, dtype=jnp.float32)
    b = jax.random.uniform(kb, (output_size,),
                           minval=-bound, maxval=bound, dtype=jnp.float32)

    # One-time parameter prep (pad + bf16 cast), then the per-call forward.
    params = prepare_mlp_toy_params(w, b)
    y = mlp_toy_arch_forward(x, params)
    y = jax.block_until_ready(y)

    # Reference in the same precision path as the kernel (bf16 in, f32 acc)
    # plus a looser check against the full-f32 reference.
    y_ref_bf16 = jnp.dot(x.astype(jnp.bfloat16), w.T.astype(jnp.bfloat16),
                         preferred_element_type=jnp.float32) + b
    y_ref_f32 = x @ w.T + b

    assert y.shape == (batch, output_size)
    assert y.dtype == jnp.float32
    assert jnp.allclose(y, y_ref_bf16, atol=1e-3, rtol=1e-3)
    assert jnp.allclose(y, y_ref_f32, atol=5e-2, rtol=5e-2)

    # Rank check matches the PyTorch module's RuntimeError.
    try:
        mlp_toy_arch_forward(x[None], params)
        raise AssertionError("expected RuntimeError for rank-3 input")
    except RuntimeError:
        pass

    print("KERNEL_OK")
</pallas_src>

<mosaic_0001>
module attributes {stable_mosaic.version = 11 : i64} {
  func.func @_linear_kernel(%arg0: i32, %arg1: i32, %arg2: i32, %arg3: memref<16x256xbf16, #tpu.memory_space<vmem>>, %arg4: memref<256x256xbf16, #tpu.memory_space<vmem>>, %arg5: memref<1x256xf32, #tpu.memory_space<vmem>>, %arg6: memref<16x256xf32, #tpu.memory_space<vmem>>, %arg7: memref<16x256xf32, #tpu.memory_space<vmem>>) attributes {dimension_semantics = [#tpu.dimension_semantics<parallel>, #tpu.dimension_semantics<parallel>, #tpu.dimension_semantics<arbitrary>], iteration_bounds = array<i64: 1, 1, 1>, scalar_prefetch = 0 : i64, scratch_operands = 1 : i64, tpu.core_type = #tpu.core_type<tc>, window_params = [{transform_indices = @transform_0, window_bounds = array<i64: 16, 256>}, {transform_indices = @transform_1, window_bounds = array<i64: 256, 256>}, {transform_indices = @transform_2, window_bounds = array<i64: 1, 256>}, {transform_indices = @transform_3, window_bounds = array<i64: 16, 256>}]} {
    %c0_i32 = arith.constant 0 : i32
    %0 = arith.cmpi eq, %arg2, %c0_i32 : i32
    %1 = arith.extui %0 : i1 to i32
    %c0_i32_0 = arith.constant 0 : i32
    %2 = arith.cmpi ne, %1, %c0_i32_0 : i32
    scf.if %2 {
      %cst_10 = arith.constant 0.000000e+00 : f32
      %12 = vector.broadcast %cst_10 : f32 to vector<16x256xf32>
      %c0_11 = arith.constant 0 : index
      %c0_12 = arith.constant 0 : index
      %13 = vector.load %arg7[%c0_11, %c0_12] : memref<16x256xf32, #tpu.memory_space<vmem>>, vector<16x256xf32>
      tpu.vector_store %arg7[%c0_11, %c0_12], %12 {strides = array<i32>} : memref<16x256xf32, #tpu.memory_space<vmem>>, vector<16x256xf32>,
    } else {
    }
    %c0 = arith.constant 0 : index
    %c0_1 = arith.constant 0 : index
    %3 = vector.load %arg7[%c0, %c0_1] : memref<16x256xf32, #tpu.memory_space<vmem>>, vector<16x256xf32>
    %c0_2 = arith.constant 0 : index
    %c0_3 = arith.constant 0 : index
    %4 = vector.load %arg3[%c0_2, %c0_3] : memref<16x256xbf16, #tpu.memory_space<vmem>>, vector<16x256xbf16>
    %c0_4 = arith.constant 0 : index
    %c0_5 = arith.constant 0 : index
    %5 = vector.load %arg4[%c0_4, %c0_5] : memref<256x256xbf16, #tpu.memory_space<vmem>>, vector<256x256xbf16>
    %cst = arith.constant dense<0.000000e+00> : vector<16x256xf32>
    %6 = tpu.matmul %4, %5, %cst {dimension_numbers = #tpu.dot_dimension_numbers<[1], [0], [0], [1], [0, 0, 1, 1], [], []>} : vector<16x256xbf16>, vector<256x256xbf16>, vector<16x256xf32> -> vector<16x256xf32>
    %7 = arith.addf %3, %6 : vector<16x256xf32>
    %c0_6 = arith.constant 0 : index
    %c0_7 = arith.constant 0 : index
    %8 = vector.load %arg7[%c0_6, %c0_7] : memref<16x256xf32, #tpu.memory_space<vmem>>, vector<16x256xf32>
    tpu.vector_store %arg7[%c0_6, %c0_7], %7 {strides = array<i32>} : memref<16x256xf32, #tpu.memory_space<vmem>>, vector<16x256xf32>,
    %c0_i32_8 = arith.constant 0 : i32
    %9 = arith.cmpi eq, %arg2, %c0_i32_8 : i32
    %10 = arith.extui %9 : i1 to i32
    %c0_i32_9 = arith.constant 0 : i32
    %11 = arith.cmpi ne, %10, %c0_i32_9 : i32
    scf.if %11 {
      %c0_10 = arith.constant 0 : index
      %c0_11 = arith.constant 0 : index
      %12 = vector.load %arg7[%c0_10, %c0_11] : memref<16x256xf32, #tpu.memory_space<vmem>>, vector<16x256xf32>
      %c0_12 = arith.constant 0 : index
      %c0_13 = arith.constant 0 : index
      %13 = vector.load %arg5[%c0_12, %c0_13] : memref<1x256xf32, #tpu.memory_space<vmem>>, vector<1x256xf32>
      %14 = vector.broadcast %13 : vector<1x256xf32> to vector<16x256xf32>
      %15 = arith.addf %12, %14 : vector<16x256xf32>
      %c0_14 = arith.constant 0 : index
      %c0_15 = arith.constant 0 : index
      %16 = vector.load %arg6[%c0_14, %c0_15] : memref<16x256xf32, #tpu.memory_space<vmem>>, vector<16x256xf32>
      tpu.vector_store %arg6[%c0_14, %c0_15], %15 {strides = array<i32>} : memref<16x256xf32, #tpu.memory_space<vmem>>, vector<16x256xf32>,
    } else {
    }
    return
  }
  func.func @transform_0(%arg0: i32, %arg1: i32, %arg2: i32) -> (i32, i32) {
    %c0_i32 = arith.constant 0 : i32
    return %arg0, %arg2 : i32, i32
  }
  func.func @transform_1(%arg0: i32, %arg1: i32, %arg2: i32) -> (i32, i32) {
    %c0_i32 = arith.constant 0 : i32
    return %arg2, %arg1 : i32, i32
  }
  func.func @transform_2(%arg0: i32, %arg1: i32, %arg2: i32) -> (i32, i32) {
    %c0_i32 = arith.constant 0 : i32
    %c0_i32_0 = arith.constant 0 : i32
    return %c0_i32, %arg1 : i32, i32
  }
  func.func @transform_3(%arg0: i32, %arg1: i32, %arg2: i32) -> (i32, i32) {
    %c0_i32 = arith.constant 0 : i32
    return %arg0, %arg1 : i32, i32
  }
}

</mosaic_0001>

<llo_original>
// kernel: tpu_custom_call.1
$region0: #{tpu_custom_call.1}
  #allocation0 [shape = 'u32[]', space=smem, size = 0x4, offset = 0x4, fixed_abs, tag = 'smem constant byte address 0x4 - core index']
  #allocation1 [shape = 'u32[144,128]{1,0:T(1,128)}', space=vmem, size = 0x12000, scoped, tag = 'internal scratch']
  #allocation2 [shape = 'f32[16,256]{1,0:T(8,128)}', space=vmem, size = 0x4000, scoped, tag = 'scratch operand']
  %s0 = inlined_call_operand.hbm [shape: bf16[16,256], index: 0, kind: input, shape index: {}]
  %s1 = inlined_call_operand.hbm [shape: bf16[256,256], index: 1, kind: input, shape index: {}]
  %s2 = inlined_call_operand.vmem [shape: f32[1,256], index: 2, kind: input, shape index: {}]
  %s3 = inlined_call_operand.hbm [shape: f32[16,256], index: 3, kind: output, shape index: {}]
  %s4 = sld [smem:[#allocation0]]
  $region38: #{tpu_custom_call.1} parent=0
    _
  %s6 = ssub.s32 1, %s4
  %s7 = scalar_select 0, %s6, %s4
  $region1: #{tpu_custom_call.1} parent=0
    #allocation3 [shape = 'u8[8192]{0}', space=vmem, size = 0x2000, scoped, tag = 'input window, operand 0, single buffered']
    #allocation4 [shape = 's32[1]{0}', space=sflag, size = 0x4, scoped, tag = 'scoped memory for tpu_custom_call.1']
    #allocation5 [shape = 's32[1]{0}', space=sflag, size = 0x4, scoped, tag = 'scoped memory for tpu_custom_call.1']
    #allocation6 [shape = 'u8[131072]{0}', space=vmem, size = 0x20000, scoped, tag = 'input window, operand 1, single buffered']
    #allocation7 [shape = 's32[1]{0}', space=sflag, size = 0x4, scoped, tag = 'scoped memory for tpu_custom_call.1']
    #allocation8 [shape = 'u8[16384]{0}', space=vmem, size = 0x4000, scoped, tag = 'output window, operand 0, single buffered']
    %8 = vsyncpa [#allocation4], 0
    %9 = vsyncpa [#allocation7], 0
    %10 = vsyncpa [#allocation5], 0
    // Predicated region
    $region2: #{tpu_custom_call.1} parent=1 // pred_check
      _
    $region3: #{tpu_custom_call.1} parent=1 // pred_check_branch
      %12 = sbr.rel (0) target = $region5
    $region4: #{tpu_custom_call.1} parent=1 // pred_region
      %s14 = ssub.s32 256, 256
      %15 = vsyncadd [#allocation4], %s14
      %s16 = sshll.u32 [#allocation3], 4
      %s17 = int_to_ptr.vmem [resolvable:$true] %s16
      %22 = dma.hbm_to_vmem [thread:$0]  %s0, 256, %s17, [#allocation4], 128, 128, 8
    $region5: #{tpu_custom_call.1} parent=1 // pred_fallthru
      _
    // Predicated region
    $region6: #{tpu_custom_call.1} parent=1 // pred_check
      _
    $region7: #{tpu_custom_call.1} parent=1 // pred_check_branch
      %24 = sbr.rel (0) target = $region9
    $region8: #{tpu_custom_call.1} parent=1 // pred_region
      %s26 = ssub.s32 4096, 4096
      %27 = vsyncadd [#allocation7], %s26
      %s28 = sshll.u32 [#allocation6], 4
      %s29 = int_to_ptr.vmem [resolvable:$true] %s28
      %34 = dma.hbm_to_vmem [thread:$0]  %s1, 4096, %s29, [#allocation7], 128, 128, 8
    $region9: #{tpu_custom_call.1} parent=1 // pred_fallthru
      _
    // Predicated region
    $region10: #{tpu_custom_call.1} parent=1 // pred_check
      _
    $region11: #{tpu_custom_call.1} parent=1 // pred_check_branch
      %36 = sbr.rel (0) target = $region13
    $region12: #{tpu_custom_call.1} parent=1 // pred_region
      _
    $region13: #{tpu_custom_call.1} parent=1 // pred_fallthru
      _
    // Predicated region
    $region14: #{tpu_custom_call.1} parent=1 // pred_check
      _
    $region15: #{tpu_custom_call.1} parent=1 // pred_check_branch
      %38 = sbr.rel (0) target = $region17
    $region16: #{tpu_custom_call.1} parent=1 // pred_region
      %39 = dma.done [#allocation4], 256
    $region17: #{tpu_custom_call.1} parent=1 // pred_fallthru
      _
    // Predicated region
    $region18: #{tpu_custom_call.1} parent=1 // pred_check
      _
    $region19: #{tpu_custom_call.1} parent=1 // pred_check_branch
      %41 = sbr.rel (0) target = $region21
    $region20: #{tpu_custom_call.1} parent=1 // pred_region
      %42 = dma.done [#allocation7], 4096
    $region21: #{tpu_custom_call.1} parent=1 // pred_fallthru
      _
    %p43 = scmp.eq.s32.totalorder 0, 0
    // Predicated region
    $region22: #{tpu_custom_call.1} parent=1 // pred_check
      %p44 = pneg %p43
    $region23: #{tpu_custom_call.1} parent=1 // pred_check_branch
      %46 = sbr.rel (%p44) target = $region25
    $region24: #{tpu_custom_call.1} parent=1 // pred_region
      %47 = vst [vmem:[#allocation2] sm:$0xff] 0.0
      %48 = vst [vmem:[#allocation2 + $0x8] sm:$0xff] 0.0
      %49 = vst [vmem:[#allocation2 + $0x10] sm:$0xff] 0.0
      %50 = vst [vmem:[#allocation2 + $0x18] sm:$0xff] 0.0
    $region25: #{tpu_custom_call.1} parent=1 // pred_fallthru
      _
    %v51 = vld [vmem:[#allocation2] sm:$0xff]
    %v52 = vld [vmem:[#allocation2 + $0x8] sm:$0xff]
    %v53 = vld [vmem:[#allocation2 + $0x10] sm:$0xff]
    %v54 = vld [vmem:[#allocation2 + $0x18] sm:$0xff]
    %v55 = vld [vmem:[#allocation3] sm:$0xff]
    %v56 = vld [vmem:[#allocation3 + $0x8] sm:$0xff]
    %v57 = vld [vmem:[#allocation6] sm:$0xff]
    %v58 = vld [vmem:[#allocation6 + $0x8] sm:$0xff]
    %v59 = vld [vmem:[#allocation6 + $0x10] sm:$0xff]
    %v60 = vld [vmem:[#allocation6 + $0x18] sm:$0xff]
    %v61 = vld [vmem:[#allocation6 + $0x20] sm:$0xff]
    %v62 = vld [vmem:[#allocation6 + $0x28] sm:$0xff]
    %v63 = vld [vmem:[#allocation6 + $0x30] sm:$0xff]
    %v64 = vld [vmem:[#allocation6 + $0x38] sm:$0xff]
    %v65 = vld [vmem:[#allocation6 + $0x40] sm:$0xff]
    %v66 = vld [vmem:[#allocation6 + $0x48] sm:$0xff]
    %v67 = vld [vmem:[#allocation6 + $0x50] sm:$0xff]
    %v68 = vld [vmem:[#allocation6 + $0x58] sm:$0xff]
    %v69 = vld [vmem:[#allocation6 + $0x60] sm:$0xff]
    %v70 = vld [vmem:[#allocation6 + $0x68] sm:$0xff]
    %v71 = vld [vmem:[#allocation6 + $0x70] sm:$0xff]
    %v72 = vld [vmem:[#allocation6 + $0x78] sm:$0xff]
    %v73 = vld [vmem:[#allocation6 + $0x80] sm:$0xff]
    %v74 = vld [vmem:[#allocation6 + $0x88] sm:$0xff]
    %v75 = vld [vmem:[#allocation6 + $0x90] sm:$0xff]
    %v76 = vld [vmem:[#allocation6 + $0x98] sm:$0xff]
    %v77 = vld [vmem:[#allocation6 + $0xa0] sm:$0xff]
    %v78 = vld [vmem:[#allocation6 + $0xa8] sm:$0xff]
    %v79 = vld [vmem:[#allocation6 + $0xb0] sm:$0xff]
    %v80 = vld [vmem:[#allocation6 + $0xb8] sm:$0xff]
    %v81 = vld [vmem:[#allocation6 + $0xc0] sm:$0xff]
    %v82 = vld [vmem:[#allocation6 + $0xc8] sm:$0xff]
    %v83 = vld [vmem:[#allocation6 + $0xd0] sm:$0xff]
    %v84 = vld [vmem:[#allocation6 + $0xd8] sm:$0xff]
    %v85 = vld [vmem:[#allocation6 + $0xe0] sm:$0xff]
    %v86 = vld [vmem:[#allocation6 + $0xe8] sm:$0xff]
    %v87 = vld [vmem:[#allocation6 + $0xf0] sm:$0xff]
    %v88 = vld [vmem:[#allocation6 + $0xf8] sm:$0xff]
    %v91 = vunpack.c.l.b16 %v55
    %v92 = vunpack.c.h.b16 %v55
    %v93 = vunpack.c.l.b16 %v56
    %v94 = vunpack.c.h.b16 %v56
    %v95 = vpack.c.b16 %v93, %v91
    %v96 = vpack.c.b16 %v94, %v92
    %v131 = vunpack.c.l.b16 %v57
    %v132 = vunpack.c.h.b16 %v57
    %v133 = vunpack.c.l.b16 %v58
    %v134 = vunpack.c.h.b16 %v58
    %v135 = vunpack.c.l.b16 %v59
    %v136 = vunpack.c.h.b16 %v59
    %v137 = vunpack.c.l.b16 %v60
    %v138 = vunpack.c.h.b16 %v60
    %v139 = vunpack.c.l.b16 %v61
    %v140 = vunpack.c.h.b16 %v61
    %v141 = vunpack.c.l.b16 %v62
    %v142 = vunpack.c.h.b16 %v62
    %v143 = vunpack.c.l.b16 %v63
    %v144 = vunpack.c.h.b16 %v63
    %v145 = vunpack.c.l.b16 %v64
    %v146 = vunpack.c.h.b16 %v64
    %v147 = vunpack.c.l.b16 %v65
    %v148 = vunpack.c.h.b16 %v65
    %v149 = vunpack.c.l.b16 %v66
    %v150 = vunpack.c.h.b16 %v66
    %v151 = vunpack.c.l.b16 %v67
    %v152 = vunpack.c.h.b16 %v67
    %v153 = vunpack.c.l.b16 %v68
    %v154 = vunpack.c.h.b16 %v68
    %v155 = vunpack.c.l.b16 %v69
    %v156 = vunpack.c.h.b16 %v69
    %v157 = vunpack.c.l.b16 %v70
    %v158 = vunpack.c.h.b16 %v70
    %v159 = vunpack.c.l.b16 %v71
    %v160 = vunpack.c.h.b16 %v71
    %v161 = vunpack.c.l.b16 %v72
    %v162 = vunpack.c.h.b16 %v72
    %v163 = vunpack.c.l.b16 %v73
    %v164 = vunpack.c.h.b16 %v73
    %v165 = vunpack.c.l.b16 %v74
    %v166 = vunpack.c.h.b16 %v74
    %v167 = vunpack.c.l.b16 %v75
    %v168 = vunpack.c.h.b16 %v75
    %v169 = vunpack.c.l.b16 %v76
    %v170 = vunpack.c.h.b16 %v76
    %v171 = vunpack.c.l.b16 %v77
    %v172 = vunpack.c.h.b16 %v77
    %v173 = vunpack.c.l.b16 %v78
    %v174 = vunpack.c.h.b16 %v78
    %v175 = vunpack.c.l.b16 %v79
    %v176 = vunpack.c.h.b16 %v79
    %v177 = vunpack.c.l.b16 %v80
    %v178 = vunpack.c.h.b16 %v80
    %v179 = vunpack.c.l.b16 %v81
    %v180 = vunpack.c.h.b16 %v81
    %v181 = vunpack.c.l.b16 %v82
    %v182 = vunpack.c.h.b16 %v82
    %v183 = vunpack.c.l.b16 %v83
    %v184 = vunpack.c.h.b16 %v83
    %v185 = vunpack.c.l.b16 %v84
    %v186 = vunpack.c.h.b16 %v84
    %v187 = vunpack.c.l.b16 %v85
    %v188 = vunpack.c.h.b16 %v85
    %v189 = vunpack.c.l.b16 %v86
    %v190 = vunpack.c.h.b16 %v86
    %v191 = vunpack.c.l.b16 %v87
    %v192 = vunpack.c.h.b16 %v87
    %v193 = vunpack.c.l.b16 %v88
    %v194 = vunpack.c.h.b16 %v88
    %v195 = vpack.c.b16 %v133, %v131
    %v196 = vpack.c.b16 %v134, %v132
    %v197 = vpack.c.b16 %v137, %v135
    %v198 = vpack.c.b16 %v138, %v136
    %v199 = vpack.c.b16 %v141, %v139
    %v200 = vpack.c.b16 %v142, %v140
    %v201 = vpack.c.b16 %v145, %v143
    %v202 = vpack.c.b16 %v146, %v144
    %v203 = vpack.c.b16 %v149, %v147
    %v204 = vpack.c.b16 %v150, %v148
    %v205 = vpack.c.b16 %v153, %v151
    %v206 = vpack.c.b16 %v154, %v152
    %v207 = vpack.c.b16 %v157, %v155
    %v208 = vpack.c.b16 %v158, %v156
    %v209 = vpack.c.b16 %v161, %v159
    %v210 = vpack.c.b16 %v162, %v160
    %v211 = vpack.c.b16 %v165, %v163
    %v212 = vpack.c.b16 %v166, %v164
    %v213 = vpack.c.b16 %v169, %v167
    %v214 = vpack.c.b16 %v170, %v168
    %v215 = vpack.c.b16 %v173, %v171
    %v216 = vpack.c.b16 %v174, %v172
    %v217 = vpack.c.b16 %v177, %v175
    %v218 = vpack.c.b16 %v178, %v176
    %v219 = vpack.c.b16 %v181, %v179
    %v220 = vpack.c.b16 %v182, %v180
    %v221 = vpack.c.b16 %v185, %v183
    %v222 = vpack.c.b16 %v186, %v184
    %v223 = vpack.c.b16 %v189, %v187
    %v224 = vpack.c.b16 %v190, %v188
    %v225 = vpack.c.b16 %v193, %v191
    %v226 = vpack.c.b16 %v194, %v192
    %259 = vmatprep.subr.bf16.mxu0 %v210
    %260 = vmatpush1.bf16.msra.mxu0 %v209
    %261 = vmatprep.subr.bf16.mxu0 %v208
    %262 = vmatpush1.bf16.msra.mxu0 %v207
    %263 = vmatprep.subr.bf16.mxu0 %v206
    %264 = vmatpush1.bf16.msra.mxu0 %v205
    %265 = vmatprep.subr.bf16.mxu0 %v204
    %266 = vmatpush1.bf16.msra.mxu0 %v203
    %267 = vmatprep.subr.bf16.mxu0 %v202
    %268 = vmatpush1.bf16.msra.mxu0 %v201
    %269 = vmatprep.subr.bf16.mxu0 %v200
    %270 = vmatpush1.bf16.msra.mxu0 %v199
    %271 = vmatprep.subr.bf16.mxu0 %v198
    %272 = vmatpush1.bf16.msra.mxu0 %v197
    %273 = vmatprep.subr.bf16.mxu0 %v196
    %274 = vmatpush1.bf16.msra.mxu0 %v195
    %275 = vmatprep.subr.bf16.mxu0 %v226
    %276 = vmatpush2.bf16.msra.mxu0 %v225
    %277 = vmatprep.subr.bf16.mxu0 %v224
    %278 = vmatpush2.bf16.msra.mxu0 %v223
    %279 = vmatprep.subr.bf16.mxu0 %v222
    %280 = vmatpush2.bf16.msra.mxu0 %v221
    %281 = vmatprep.subr.bf16.mxu0 %v220
    %282 = vmatpush2.bf16.msra.mxu0 %v219
    %283 = vmatprep.subr.bf16.mxu0 %v218
    %284 = vmatpush2.bf16.msra.mxu0 %v217
    %285 = vmatprep.subr.bf16.mxu0 %v216
    %286 = vmatpush2.bf16.msra.mxu0 %v215
    %287 = vmatprep.subr.bf16.mxu0 %v214
    %288 = vmatpush2.bf16.msra.mxu0 %v213
    %289 = vmatprep.subr.bf16.mxu0 %v212
    %290 = vmatpush2.bf16.msra.mxu0 %v211
    %291 = vmatprep.mubr.bf16.mxu0 %v96
    %292 = vmatmul.mubr.bf16.gmra.mxu0 %v95
    %v293 = vpop.f32.mrf.mxu0
    %v294 = vadd.f32 0.0, %v293
    %v295 = vpop.f32.mrf.mxu0
    %v296 = vadd.f32 0.0, %v295
    %v297 = vpop.f32.mrf.mxu0
    %v298 = vadd.f32 0.0, %v297
    %v299 = vpop.f32.mrf.mxu0
    %v300 = vadd.f32 0.0, %v299
    %301 = vdwg.mxu0
    %v302 = vadd.f32 %v51, %v294
    %v303 = vadd.f32 %v52, %v296
    %v304 = vadd.f32 %v53, %v298
    %v305 = vadd.f32 %v54, %v300
    %306 = vst [vmem:[#allocation2] sm:$0xff] %v302
    %307 = vst [vmem:[#allocation2 + $0x8] sm:$0xff] %v303
    %308 = vst [vmem:[#allocation2 + $0x10] sm:$0xff] %v304
    %309 = vst [vmem:[#allocation2 + $0x18] sm:$0xff] %v305
    // Predicated region
    $region26: #{tpu_custom_call.1} parent=1 // pred_check
      %p310 = pneg %p43
    $region27: #{tpu_custom_call.1} parent=1 // pred_check_branch
      %312 = sbr.rel (%p310) target = $region29
    $region28: #{tpu_custom_call.1} parent=1 // pred_region
      %v313 = vld [vmem:[#allocation2] sm:$0xff]
      %v314 = vld [vmem:[#allocation2 + $0x8] sm:$0xff]
      %v315 = vld [vmem:[#allocation2 + $0x10] sm:$0xff]
      %v316 = vld [vmem:[#allocation2 + $0x18] sm:$0xff]
      %v317 = vld [vmem:[%s2] sm:$0x3]
      %v319 = vlaneseq
      %v320 = vshrl.u32 %v319, 7
      %v321 = vsub.s32 0, %v320
      %v322 = vrot.slane %v317, %v321
      %v323 = vlaneseq
      %v324 = vshrl.u32 %v323, 7
      %v325 = vsub.s32 1, %v324
      %v326 = vrot.slane %v317, %v325
      %v329 = vadd.f32 %v313, %v322
      %v330 = vadd.f32 %v314, %v326
      %v331 = vadd.f32 %v315, %v322
      %v332 = vadd.f32 %v316, %v326
      %333 = vst [vmem:[#allocation8] sm:$0xff] %v329
      %334 = vst [vmem:[#allocation8 + $0x8] sm:$0xff] %v330
      %335 = vst [vmem:[#allocation8 + $0x10] sm:$0xff] %v331
      %336 = vst [vmem:[#allocation8 + $0x18] sm:$0xff] %v332
    $region29: #{tpu_custom_call.1} parent=1 // pred_fallthru
      _
    // Predicated region
    $region30: #{tpu_custom_call.1} parent=1 // pred_check
      _
    $region31: #{tpu_custom_call.1} parent=1 // pred_check_branch
      %338 = sbr.rel (0) target = $region33
    $region32: #{tpu_custom_call.1} parent=1 // pred_region
      %s340 = ssub.s32 512, 512
      %341 = vsyncadd [#allocation5], %s340
      %s342 = sshll.u32 [#allocation8], 4
      %s343 = int_to_ptr.vmem [resolvable:$true] %s342
      %348 = dma.vmem_to_hbm [thread:$0]  %s343, 512, %s3, [#allocation5], 256, 256, 16
    $region33: #{tpu_custom_call.1} parent=1 // pred_fallthru
      _
    // Predicated region
    $region34: #{tpu_custom_call.1} parent=1 // pred_check
      _
    $region35: #{tpu_custom_call.1} parent=1 // pred_check_branch
      %350 = sbr.rel (0) target = $region37
    $region36: #{tpu_custom_call.1} parent=1 // pred_region
      %351 = dma.done [#allocation5], 512
    $region37: #{tpu_custom_call.1} parent=1 // pred_fallthru
      _
    %352 = vsyncpa [#allocation4], 1
    %353 = vsyncpa [#allocation7], 1
    %354 = vsyncpa [#allocation5], 1

</llo_original>
